<compile_context>
chip_gen: v6e
topology: v6e:2x2x1
jax: 0.10.0
libtpu: 0.0.40
codegen_flags: <defaults>
</compile_context>

<pallas_src>
import functools

import jax
import jax.numpy as jnp
import numpy as np
from jax.experimental import pallas as pl
from jax.experimental.pallas import tpu as pltpu


def _round_up(x, m):
    return (x + m - 1) // m * m


def _cdiv(a, b):
    return (a + b - 1) // b


def _fused_gcn_kernel(self_ref, neigh_ref, w_self_ref, w_neigh_ref, b_ref,
                      out_ref):
    """out = relu(self @ W_self + neigh_flat @ W_neigh_tiled + b) per batch tile.

    self_ref   : (TB, F)        bf16
    neigh_ref  : (TB, S*F)      bf16  (flattened sampled-neighbor features)
    w_self_ref : (F, H_pad)     bf16
    w_neigh_ref: (S*F, H_pad)   bf16  (W_neigh / S tiled S times: folds the mean)
    b_ref      : (1, H_pad)     f32
    out_ref    : (TB, H_pad)    bf16
    """
    acc = jnp.dot(self_ref[...], w_self_ref[...],
                  preferred_element_type=jnp.float32)
    acc = acc + jnp.dot(neigh_ref[...], w_neigh_ref[...],
                        preferred_element_type=jnp.float32)
    acc = acc + b_ref[...]                                  # f32 broadcast add
    out_ref[...] = jnp.maximum(acc, 0.0).astype(out_ref.dtype)


def prepare_params(fc_weight, fc_bias, num_feats, num_samples,
                   param_dtype=jnp.bfloat16):
    """Fold mean-aggregation + concat into lane-padded weights (one-time).

    fc_weight : (H, 2F)  PyTorch nn.Linear weight.   fc_bias : (H,)
    Returns (w_self (F, H_pad), w_neigh_tiled (S*F, H_pad), bias (1, H_pad) f32, H).
    """
    H = fc_weight.shape[0]
    F = int(num_feats)
    S = int(num_samples)
    H_pad = _round_up(max(H, 128), 128)

    w_t = fc_weight.T.astype(jnp.float32)                   # (2F, H)
    w_self = jnp.pad(w_t[:F, :], ((0, 0), (0, H_pad - H))).astype(param_dtype)
    # mean over S neighbors == (1/S) * sum -> fold 1/S into the tiled weight.
    w_neigh = jnp.tile(w_t[F:, :] / float(S), (S, 1))        # (S*F, H)
    w_neigh = jnp.pad(w_neigh, ((0, 0), (0, H_pad - H))).astype(param_dtype)
    # TODO(synk): for large S*F on v5e, keep W_neigh un-tiled and do the mean
    #             in-kernel to avoid (S+1)/2 x MXU FLOPs / weight residency.

    bias_pad = jnp.pad(fc_bias.astype(jnp.float32),
                       (0, H_pad - H)).reshape(1, H_pad)
    return w_self, w_neigh, bias_pad, H


def _choose_block_b(b_rows, k_total, h_pad, x_bytes, out_bytes, resident_bytes,
                    budget_bytes=24 * 1024 * 1024, max_block=4096):
    """Largest power-of-two batch tile whose working set (incl. resident
    weights) fits the VMEM budget."""
    tb = max_block
    while tb > 8:
        streamed = 2 * tb * k_total * x_bytes + 2 * tb * h_pad * out_bytes
        if resident_bytes + streamed <= budget_bytes and tb <= _round_up(b_rows, 8):
            break
        tb //= 2
    return max(tb, 8)


@functools.partial(jax.jit, static_argnames=("block_b",))
def graph_convolution_forward(self_feats, neigh_feats, w_self, w_neigh,
                              bias_pad, block_b=None):
    """relu([self || mean(neigh)] @ W + b), batch-tiled, bf16 in / bf16 out.

    Returns a padded (b_pad, H_pad) bf16 array; valid region is
    [:B, :num_hidden] (trailing slice deferred to the consumer).
    """
    B, F = self_feats.shape
    _, S, Fn = neigh_feats.shape
    assert Fn == F
    K_self, H_pad = w_self.shape
    K_neigh, _ = w_neigh.shape
    assert K_self == F and K_neigh == S * F, "weights must come from prepare_params"
    K = K_self + K_neigh

    x_bytes = jnp.dtype(w_self.dtype).itemsize
    out_dtype = jnp.bfloat16
    out_bytes = jnp.dtype(out_dtype).itemsize

    x_self = self_feats.astype(w_self.dtype)                 # (B, F)
    x_neigh = neigh_feats.reshape(B, S * F).astype(w_self.dtype)  # free reshape

    # Resident VMEM (weights + bias, x2 for pipeline buffering conservatism).
    resident = 2 * (K * H_pad * x_bytes + H_pad * 4)

    if block_b is None:
        block_b = _choose_block_b(B, K, H_pad, x_bytes, out_bytes, resident)
        # v7x: keep >=4 grid steps so both TensorCores (megacore "parallel"
        # sharding) get work; also amortizes ~0.35us/step pipeline overhead.
        block_b = min(block_b, max(8, _round_up(_cdiv(B, 4), 8)))
    block_b = max(8, _round_up(int(block_b), 8) if int(block_b) >= 8
                  else 8)

    b_pad = _round_up(B, block_b)
    if b_pad != B:
        # Fallback only for ragged batches; demo sizes never hit this.
        x_self = jnp.pad(x_self, ((0, b_pad - B), (0, 0)))
        x_neigh = jnp.pad(x_neigh, ((0, b_pad - B), (0, 0)))

    grid = (b_pad // block_b,)

    streamed = 2 * block_b * K * x_bytes + 2 * block_b * H_pad * out_bytes
    need = resident + streamed
    # Size to real need (+2x headroom), never request the entire 64 MiB of v7x.
    vmem_limit = int(min(64 * 1024 * 1024, max(4 * 1024 * 1024, 2 * need)))

    cost = pl.CostEstimate(
        flops=2 * b_pad * K * H_pad,
        transcendentals=0,
        bytes_accessed=(b_pad * K * x_bytes            # activations in
                        + K * H_pad * x_bytes + H_pad * 4   # weights + bias
                        + b_pad * H_pad * out_bytes))  # output

    out = pl.pallas_call(
        _fused_gcn_kernel,
        out_shape=jax.ShapeDtypeStruct((b_pad, H_pad), out_dtype),
        grid=grid,
        in_specs=[
            pl.BlockSpec((block_b, K_self), lambda i: (i, 0)),   # self feats
            pl.BlockSpec((block_b, K_neigh), lambda i: (i, 0)),  # neigh feats
            pl.BlockSpec((K_self, H_pad), lambda i: (0, 0)),     # resident W_self
            pl.BlockSpec((K_neigh, H_pad), lambda i: (0, 0)),    # resident W_neigh
            pl.BlockSpec((1, H_pad), lambda i: (0, 0)),          # resident bias
        ],
        out_specs=pl.BlockSpec((block_b, H_pad), lambda i: (i, 0)),
        compiler_params=pltpu.CompilerParams(
            dimension_semantics=("parallel",),
            vmem_limit_bytes=vmem_limit),
        cost_estimate=cost,
    )(x_self, x_neigh, w_self, w_neigh, bias_pad)

    return out


if __name__ == "__main__":
    # Module-consistent sizes: num_feats=16, num_hidden=32, num_samples=5.
    # Batch large enough for >=4 grid steps (v7x megacore + pipelining).
    N_NODES = 64
    NUM_FEATS = 16
    NUM_HIDDEN = 32
    NUM_SAMPLES = 5
    BATCH = 512

    key = jax.random.PRNGKey(0)
    k_feat, k_w, k_b, k_adj = jax.random.split(key, 4)

    # Node feature matrix (#nodes, #features); cast to bf16 ONCE before the
    # gather so the gather moves half the bytes and the kernel gets bf16.
    feats_f32 = jax.random.normal(k_feat, (N_NODES, NUM_FEATS),
                                  dtype=jnp.float32)
    feats_bf16 = feats_f32.astype(jnp.bfloat16)

    # nn.Linear(num_feats * 2, num_hidden): weight (H, 2F), bias (H,).
    bound = 1.0 / np.sqrt(2 * NUM_FEATS)
    fc_weight = jax.random.uniform(k_w, (NUM_HIDDEN, 2 * NUM_FEATS),
                                   minval=-bound, maxval=bound,
                                   dtype=jnp.float32)
    fc_bias = jax.random.uniform(k_b, (NUM_HIDDEN,),
                                 minval=-bound, maxval=bound,
                                 dtype=jnp.float32)

    # Host glue: deterministic "adjacency sampling" + feature gather.
    # TODO(synk): fuse this gather into the kernel (see header note).
    batch_ids = jnp.arange(BATCH, dtype=jnp.int32) % N_NODES
    neigh_ids = jax.random.randint(k_adj, (BATCH, NUM_SAMPLES),
                                   minval=0, maxval=N_NODES, dtype=jnp.int32)
    self_feats = feats_bf16[batch_ids]                  # (B, F)    bf16
    neigh_feats = feats_bf16[neigh_ids]                 # (B, S, F) bf16

    # One-time parameter prep: fold mean + concat into padded weights.
    w_self, w_neigh, bias_pad, H = prepare_params(fc_weight, fc_bias,
                                                  NUM_FEATS, NUM_SAMPLES)

    out = graph_convolution_forward(self_feats, neigh_feats,
                                    w_self, w_neigh, bias_pad)
    out = jax.block_until_ready(out)

    # Valid region of the padded output.
    out_valid = np.asarray(out[:BATCH, :NUM_HIDDEN], dtype=np.float32)

    # (1) Tight check against the same fused bf16-quantized math the kernel
    #     runs (differences: MXU accumulation order + bf16 output cast).
    x_self_f = self_feats.astype(jnp.float32)
    x_neigh_f = neigh_feats.reshape(BATCH, -1).astype(jnp.float32)
    ref_tight = jnp.maximum(
        x_self_f @ w_self.astype(jnp.float32)
        + x_neigh_f @ w_neigh.astype(jnp.float32)
        + bias_pad, 0.0)[:, :NUM_HIDDEN]
    ref_tight = ref_tight.astype(jnp.bfloat16).astype(jnp.float32)
    np.testing.assert_allclose(out_valid, np.asarray(ref_tight),
                               rtol=2e-2, atol=2e-2)

    # (2) Sanity check against the full-f32 module math (tolerance covers the
    #     bf16 quantization of activations, weights and output).
    agg = jnp.mean(feats_f32[neigh_ids], axis=1)
    ref_f32 = jnp.maximum(
        jnp.concatenate([feats_f32[batch_ids], agg], axis=1) @ fc_weight.T
        + fc_bias, 0.0)
    np.testing.assert_allclose(out_valid, np.asarray(ref_f32),
                               rtol=1e-1, atol=1e-1)

    print("KERNEL_OK")
</pallas_src>

<mosaic_0001>
module attributes {stable_mosaic.version = 11 : i64} {
  func.func @_fused_gcn_kernel(%arg0: i32, %arg1: memref<128x16xbf16, #tpu.memory_space<vmem>>, %arg2: memref<128x80xbf16, #tpu.memory_space<vmem>>, %arg3: memref<16x128xbf16, #tpu.memory_space<vmem>>, %arg4: memref<80x128xbf16, #tpu.memory_space<vmem>>, %arg5: memref<1x128xf32, #tpu.memory_space<vmem>>, %arg6: memref<128x128xbf16, #tpu.memory_space<vmem>>) attributes {dimension_semantics = [#tpu.dimension_semantics<parallel>], iteration_bounds = array<i64: 4>, scalar_prefetch = 0 : i64, scratch_operands = 0 : i64, tpu.core_type = #tpu.core_type<tc>, window_params = [{transform_indices = @transform_0, window_bounds = array<i64: 128, 16>}, {transform_indices = @transform_1, window_bounds = array<i64: 128, 80>}, {pipeline_mode = #tpu.pipeline_mode<synchronous>, transform_indices = @transform_2, window_bounds = array<i64: 16, 128>}, {pipeline_mode = #tpu.pipeline_mode<synchronous>, transform_indices = @transform_3, window_bounds = array<i64: 80, 128>}, {pipeline_mode = #tpu.pipeline_mode<synchronous>, transform_indices = @transform_4, window_bounds = array<i64: 1, 128>}, {transform_indices = @transform_5, window_bounds = array<i64: 128, 128>}]} {
    %c0 = arith.constant 0 : index
    %c0_0 = arith.constant 0 : index
    %0 = vector.load %arg1[%c0, %c0_0] : memref<128x16xbf16, #tpu.memory_space<vmem>>, vector<128x16xbf16>
    %c0_1 = arith.constant 0 : index
    %c0_2 = arith.constant 0 : index
    %1 = vector.load %arg3[%c0_1, %c0_2] : memref<16x128xbf16, #tpu.memory_space<vmem>>, vector<16x128xbf16>
    %cst = arith.constant dense<0.000000e+00> : vector<128x128xf32>
    %2 = tpu.matmul %0, %1, %cst {dimension_numbers = #tpu.dot_dimension_numbers<[1], [0], [0], [1], [0, 0, 1, 1], [], []>} : vector<128x16xbf16>, vector<16x128xbf16>, vector<128x128xf32> -> vector<128x128xf32>
    %c0_3 = arith.constant 0 : index
    %c0_4 = arith.constant 0 : index
    %3 = vector.load %arg2[%c0_3, %c0_4] : memref<128x80xbf16, #tpu.memory_space<vmem>>, vector<128x80xbf16>
    %c0_5 = arith.constant 0 : index
    %c0_6 = arith.constant 0 : index
    %4 = vector.load %arg4[%c0_5, %c0_6] : memref<80x128xbf16, #tpu.memory_space<vmem>>, vector<80x128xbf16>
    %cst_7 = arith.constant dense<0.000000e+00> : vector<128x128xf32>
    %5 = tpu.matmul %3, %4, %cst_7 {dimension_numbers = #tpu.dot_dimension_numbers<[1], [0], [0], [1], [0, 0, 1, 1], [], []>} : vector<128x80xbf16>, vector<80x128xbf16>, vector<128x128xf32> -> vector<128x128xf32>
    %6 = arith.addf %2, %5 : vector<128x128xf32>
    %c0_8 = arith.constant 0 : index
    %c0_9 = arith.constant 0 : index
    %7 = vector.load %arg5[%c0_8, %c0_9] : memref<1x128xf32, #tpu.memory_space<vmem>>, vector<1x128xf32>
    %8 = vector.broadcast %7 : vector<1x128xf32> to vector<128x128xf32>
    %9 = arith.addf %6, %8 : vector<128x128xf32>
    %cst_10 = arith.constant 0.000000e+00 : f32
    %10 = vector.broadcast %cst_10 : f32 to vector<128x128xf32>
    %11 = arith.maximumf %9, %10 : vector<128x128xf32>
    %12 = arith.truncf %11 : vector<128x128xf32> to vector<128x128xbf16>
    %c0_11 = arith.constant 0 : index
    %c0_12 = arith.constant 0 : index
    %13 = vector.load %arg6[%c0_11, %c0_12] : memref<128x128xbf16, #tpu.memory_space<vmem>>, vector<128x128xbf16>
    tpu.vector_store %arg6[%c0_11, %c0_12], %12 {strides = array<i32>} : memref<128x128xbf16, #tpu.memory_space<vmem>>, vector<128x128xbf16>,
    return
  }
  func.func @transform_0(%arg0: i32) -> (i32, i32) {
    %c0_i32 = arith.constant 0 : i32
    %c0_i32_0 = arith.constant 0 : i32
    return %arg0, %c0_i32 : i32, i32
  }
  func.func @transform_1(%arg0: i32) -> (i32, i32) {
    %c0_i32 = arith.constant 0 : i32
    %c0_i32_0 = arith.constant 0 : i32
    return %arg0, %c0_i32 : i32, i32
  }
  func.func @transform_2(%arg0: i32) -> (i32, i32) {
    %c0_i32 = arith.constant 0 : i32
    %c0_i32_0 = arith.constant 0 : i32
    %c0_i32_1 = arith.constant 0 : i32
    return %c0_i32, %c0_i32_0 : i32, i32
  }
  func.func @transform_3(%arg0: i32) -> (i32, i32) {
    %c0_i32 = arith.constant 0 : i32
    %c0_i32_0 = arith.constant 0 : i32
    %c0_i32_1 = arith.constant 0 : i32
    return %c0_i32, %c0_i32_0 : i32, i32
  }
  func.func @transform_4(%arg0: i32) -> (i32, i32) {
    %c0_i32 = arith.constant 0 : i32
    %c0_i32_0 = arith.constant 0 : i32
    %c0_i32_1 = arith.constant 0 : i32
    return %c0_i32, %c0_i32_0 : i32, i32
  }
  func.func @transform_5(%arg0: i32) -> (i32, i32) {
    %c0_i32 = arith.constant 0 : i32
    %c0_i32_0 = arith.constant 0 : i32
    return %arg0, %c0_i32 : i32, i32
  }
}

</mosaic_0001>

<llo_original>
// kernel: graph_convolution_forward.1
$region0: #{graph_convolution_forward.1}
  #allocation0 [shape = 'u32[]', space=smem, size = 0x4, offset = 0x4, fixed_abs, tag = 'smem constant byte address 0x4 - core index']
  #allocation1 [shape = 'u32[144,128]{1,0:T(1,128)}', space=vmem, size = 0x12000, scoped, tag = 'internal scratch']
  %s0 = inlined_call_operand.vmem [shape: bf16[512,16], index: 0, kind: input, shape index: {}]
  %s1 = inlined_call_operand.vmem [shape: bf16[512,80], index: 1, kind: input, shape index: {}]
  %s2 = inlined_call_operand.vmem [shape: bf16[16,128], index: 2, kind: input, shape index: {}]
  %s3 = inlined_call_operand.vmem [shape: bf16[80,128], index: 3, kind: input, shape index: {}]
  %s4 = inlined_call_operand.vmem [shape: f32[1,128], index: 4, kind: input, shape index: {}]
  %s5 = inlined_call_operand.hbm [shape: bf16[512,128], index: 5, kind: output, shape index: {}]
  %s6 = sld [smem:[#allocation0]]
  $region53: #{graph_convolution_forward.1} parent=0
    _
  %s8 = ssub.s32 1, %s6
  %s9 = scalar_select 0, %s8, %s6
  $region1: #{graph_convolution_forward.1} parent=0
    #allocation2 [shape = 'u8[65536]{0}', space=vmem, size = 0x10000, scoped, tag = 'output window, operand 0']
    #allocation3 [shape = 's32[2]{0}', space=sflag, size = 0x8, scoped, tag = 'scoped memory for graph_convolution_forward.1']
    %10 = vsyncpa [#allocation3], 0
    %s11 = scalar_lea.sflag [#allocation3], 1
    %12 = vsyncpa %s11, 0
    loop: start=0, step=1, limit=6
    $region2: #{graph_convolution_forward.1} parent=1 // loop_pre_header
      _
    $region3: #{graph_convolution_forward.1} parent=1 // loop_header
      %s14 = sphi 0, %s18
      %p15 = scmp.ge.s32.totalorder %s14, 6
      %s24 = sphi 0, %s26
      %s27 = sphi 0, %s24
      %s28 = sphi 0, %s27
      %s44 = sphi 0, %s28
      %s50 = sphi 0, %s52
      %s53 = sphi 0, %s50
      %s54 = sphi 0, %s53
      %s70 = sphi 0, %s54
      %s74 = sphi 0, %s74
      %s76 = sphi 0, %s74
      %s77 = sphi 0, %s76
      %s91 = sphi 0, %s77
      %s95 = sphi 0, %s95
      %s97 = sphi 0, %s95
      %s98 = sphi 0, %s97
      %s112 = sphi 0, %s98
      %s116 = sphi 0, %s116
      %s118 = sphi 0, %s116
      %s119 = sphi 0, %s118
      %s133 = sphi 0, %s119
      %s139 = sphi 0, %s141
      %s142 = sphi 0, %s139
      %s143 = sphi 0, %s142
      %s159 = sphi 0, %s143
    $region4: #{graph_convolution_forward.1} parent=1 // loop_header_branch
      %17 = sbr.rel (%p15) target = $region8
    $region5: #{graph_convolution_forward.1} parent=1 // loop_body
      %s19 = ssub.s32 %s14, 1
      %s20 = ssub.s32 %s14, 2
      %s21 = sadd.s32 %s14, 1
      %s22 = ssub.s32 %s14, %s21
      %p23 = scmp.eq.s32.totalorder %s22, 0
      %s25 = sadd.s32 %s24, 1
      %s26 = scalar_select %p23, %s24, %s25
      %p29 = pneg %p23
      %p30 = scmp.eq.s32.totalorder %s14, 3
      %p31 = por %p29, %p30
      %p32 = scmp.ne.s32.totalorder %s24, %s27
      %p33 = scmp.eq.s32.totalorder %s14, 0
      %p34 = por %p32, %p33
      %p35 = scmp.ne.s32.totalorder %s24, %s27
      %p36 = scmp.eq.s32.totalorder %s19, 3
      %p37 = por %p35, %p36
      %p38 = scmp.ne.s32.totalorder %s27, %s28
      %p39 = scmp.eq.s32.totalorder %s19, 0
      %p40 = por %p38, %p39
      %p41 = scmp.ne.s32.totalorder %s27, %s28
      %p42 = scmp.eq.s32.totalorder %s20, 3
      %p43 = por %p41, %p42
      %p45 = scmp.ne.s32.totalorder %s28, %s44
      %p46 = scmp.eq.s32.totalorder %s20, 0
      %p47 = por %p45, %p46
      %s48 = ssub.s32 %s14, %s21
      %p49 = scmp.eq.s32.totalorder %s48, 0
      %s51 = sadd.s32 %s50, 1
      %s52 = scalar_select %p49, %s50, %s51
      %p55 = pneg %p49
      %p56 = scmp.eq.s32.totalorder %s14, 3
      %p57 = por %p55, %p56
      %p58 = scmp.ne.s32.totalorder %s50, %s53
      %p59 = scmp.eq.s32.totalorder %s14, 0
      %p60 = por %p58, %p59
      %p61 = scmp.ne.s32.totalorder %s50, %s53
      %p62 = scmp.eq.s32.totalorder %s19, 3
      %p63 = por %p61, %p62
      %p64 = scmp.ne.s32.totalorder %s53, %s54
      %p65 = scmp.eq.s32.totalorder %s19, 0
      %p66 = por %p64, %p65
      %p67 = scmp.ne.s32.totalorder %s53, %s54
      %p68 = scmp.eq.s32.totalorder %s20, 3
      %p69 = por %p67, %p68
      %p71 = scmp.ne.s32.totalorder %s54, %s70
      %p72 = scmp.eq.s32.totalorder %s20, 0
      %p73 = por %p71, %p72
      %s75 = sadd.s32 %s74, 1
      %p78 = scmp.eq.s32.totalorder %s14, 3
      %p79 = scmp.ne.s32.totalorder %s74, %s76
      %p80 = scmp.eq.s32.totalorder %s14, 0
      %p81 = por %p79, %p80
      %p82 = scmp.ne.s32.totalorder %s74, %s76
      %p83 = scmp.eq.s32.totalorder %s19, 3
      %p84 = por %p82, %p83
      %p85 = scmp.ne.s32.totalorder %s76, %s77
      %p86 = scmp.eq.s32.totalorder %s19, 0
      %p87 = por %p85, %p86
      %p88 = scmp.ne.s32.totalorder %s76, %s77
      %p89 = scmp.eq.s32.totalorder %s20, 3
      %p90 = por %p88, %p89
      %p92 = scmp.ne.s32.totalorder %s77, %s91
      %p93 = scmp.eq.s32.totalorder %s20, 0
      %p94 = por %p92, %p93
      %s96 = sadd.s32 %s95, 1
      %p99 = scmp.eq.s32.totalorder %s14, 3
      %p100 = scmp.ne.s32.totalorder %s95, %s97
      %p101 = scmp.eq.s32.totalorder %s14, 0
      %p102 = por %p100, %p101
      %p103 = scmp.ne.s32.totalorder %s95, %s97
      %p104 = scmp.eq.s32.totalorder %s19, 3
      %p105 = por %p103, %p104
      %p106 = scmp.ne.s32.totalorder %s97, %s98
      %p107 = scmp.eq.s32.totalorder %s19, 0
      %p108 = por %p106, %p107
      %p109 = scmp.ne.s32.totalorder %s97, %s98
      %p110 = scmp.eq.s32.totalorder %s20, 3
      %p111 = por %p109, %p110
      %p113 = scmp.ne.s32.totalorder %s98, %s112
      %p114 = scmp.eq.s32.totalorder %s20, 0
      %p115 = por %p113, %p114
      %s117 = sadd.s32 %s116, 1
      %p120 = scmp.eq.s32.totalorder %s14, 3
      %p121 = scmp.ne.s32.totalorder %s116, %s118
      %p122 = scmp.eq.s32.totalorder %s14, 0
      %p123 = por %p121, %p122
      %p124 = scmp.ne.s32.totalorder %s116, %s118
      %p125 = scmp.eq.s32.totalorder %s19, 3
      %p126 = por %p124, %p125
      %p127 = scmp.ne.s32.totalorder %s118, %s119
      %p128 = scmp.eq.s32.totalorder %s19, 0
      %p129 = por %p127, %p128
      %p130 = scmp.ne.s32.totalorder %s118, %s119
      %p131 = scmp.eq.s32.totalorder %s20, 3
      %p132 = por %p130, %p131
      %p134 = scmp.ne.s32.totalorder %s119, %s133
      %p135 = scmp.eq.s32.totalorder %s20, 0
      %p136 = por %p134, %p135
      %s137 = ssub.s32 %s14, %s21
      %p138 = scmp.eq.s32.totalorder %s137, 0
      %s140 = sadd.s32 %s139, 1
      %s141 = scalar_select %p138, %s139, %s140
      %p144 = pneg %p138
      %p145 = scmp.eq.s32.totalorder %s14, 3
      %p146 = por %p144, %p145
      %p147 = scmp.ne.s32.totalorder %s139, %s142
      %p148 = scmp.eq.s32.totalorder %s14, 0
      %p149 = por %p147, %p148
      %p150 = scmp.ne.s32.totalorder %s139, %s142
      %p151 = scmp.eq.s32.totalorder %s19, 3
      %p152 = por %p150, %p151
      %p153 = scmp.ne.s32.totalorder %s142, %s143
      %p154 = scmp.eq.s32.totalorder %s19, 0
      %p155 = por %p153, %p154
      %p156 = scmp.ne.s32.totalorder %s142, %s143
      %p157 = scmp.eq.s32.totalorder %s20, 3
      %p158 = por %p156, %p157
      %p160 = scmp.ne.s32.totalorder %s143, %s159
      %p161 = scmp.eq.s32.totalorder %s20, 0
      %p162 = por %p160, %p161
      %p163 = scmp.le.s32.totalorder 1, %s14
      %p164 = scmp.lt.s32.totalorder %s14, 5
      %p165 = pnand %p163, %p164
      %p166 = pneg %p165
      // Predicated region
      $region9: #{graph_convolution_forward.1} parent=5 // pred_check
        _
      $region10: #{graph_convolution_forward.1} parent=5 // pred_check_branch
        %168 = sbr.rel (%p165) target = $region12
      $region11: #{graph_convolution_forward.1} parent=5 // pred_region
        %s169 = ssub.s32 %s14, 1
        // Predicated region
        $region13: #{graph_convolution_forward.1} parent=11 // pred_check
          %p170 = pneg %p87
        $region14: #{graph_convolution_forward.1} parent=11 // pred_check_branch
          %172 = sbr.rel (%p170) target = $region16
        $region15: #{graph_convolution_forward.1} parent=11 // pred_region
          _
        $region16: #{graph_convolution_forward.1} parent=11 // pred_fallthru
          _
        // Predicated region
        $region17: #{graph_convolution_forward.1} parent=11 // pred_check
          %p173 = pneg %p108
        $region18: #{graph_convolution_forward.1} parent=11 // pred_check_branch
          %175 = sbr.rel (%p173) target = $region20
        $region19: #{graph_convolution_forward.1} parent=11 // pred_region
          _
        $region20: #{graph_convolution_forward.1} parent=11 // pred_fallthru
          _
        // Predicated region
        $region21: #{graph_convolution_forward.1} parent=11 // pred_check
          %p176 = pneg %p129
        $region22: #{graph_convolution_forward.1} parent=11 // pred_check_branch
          %178 = sbr.rel (%p176) target = $region24
        $region23: #{graph_convolution_forward.1} parent=11 // pred_region
          _
        $region24: #{graph_convolution_forward.1} parent=11 // pred_fallthru
          _
      $region12: #{graph_convolution_forward.1} parent=5 // pred_fallthru
        _
      %p179 = scmp.lt.s32.totalorder %s14, 4
      // Predicated region
      $region25: #{graph_convolution_forward.1} parent=5 // pred_check
        %p180 = pneg %p179
      $region26: #{graph_convolution_forward.1} parent=5 // pred_check_branch
        %182 = sbr.rel (%p180) target = $region28
      $region27: #{graph_convolution_forward.1} parent=5 // pred_region
        // Predicated region
        $region29: #{graph_convolution_forward.1} parent=27 // pred_check
          %p183 = pneg %p34
        $region30: #{graph_convolution_forward.1} parent=27 // pred_check_branch
          %185 = sbr.rel (%p183) target = $region32
        $region31: #{graph_convolution_forward.1} parent=27 // pred_region
          %s186 = smul.u32 16, %s14
          %p187 = scmp.lt.s32.totalorder %s186, 63
          %s188 = scalar_select %p187, %s186, 63
          %s189 = smul.addr %s188, 4
          %s190 = scalar_lea.vmem %s0, %s189
          %s191 = smul.u32 16, %s14
        $region32: #{graph_convolution_forward.1} parent=27 // pred_fallthru
          _
        // Predicated region
        $region33: #{graph_convolution_forward.1} parent=27 // pred_check
          %p192 = pneg %p60
        $region34: #{graph_convolution_forward.1} parent=27 // pred_check_branch
          %194 = sbr.rel (%p192) target = $region36
        $region35: #{graph_convolution_forward.1} parent=27 // pred_region
          %s195 = smul.u32 16, %s14
          %p196 = scmp.lt.s32.totalorder %s195, 63
          %s197 = scalar_select %p196, %s195, 63
          %s198 = smul.addr %s197, 4
          %s199 = scalar_lea.vmem %s1, %s198
          %s200 = smul.u32 16, %s14
        $region36: #{graph_convolution_forward.1} parent=27 // pred_fallthru
          _
      $region28: #{graph_convolution_forward.1} parent=5 // pred_fallthru
        _
      %p201 = scmp.le.s32.totalorder 1, %s14
      %p202 = scmp.lt.s32.totalorder %s14, 5
      %p203 = pnand %p201, %p202
      %p204 = pneg %p203
      // Predicated region
      $region37: #{graph_convolution_forward.1} parent=5 // pred_check
        _
      $region38: #{graph_convolution_forward.1} parent=5 // pred_check_branch
        %206 = sbr.rel (%p203) target = $region40
      $region39: #{graph_convolution_forward.1} parent=5 // pred_region
        %s207 = ssub.s32 %s14, 1
        %s208 = smul.u32 16, %s19
        %p209 = scmp.lt.s32.totalorder %s208, 63
        %s210 = scalar_select %p209, %s208, 63
        %s211 = smul.addr %s210, 4
        %s212 = scalar_lea.vmem %s0, %s211
        %p213 = pneg %p40
        %p214 = pneg %p37
        %s215 = smul.u32 16, %s19
        %p216 = scmp.lt.s32.totalorder %s215, 63
        %s217 = scalar_select %p216, %s215, 63
        %s218 = smul.addr %s217, 4
        %s219 = scalar_lea.vmem %s1, %s218
        %p220 = pneg %p66
        %p221 = pneg %p63
        %p222 = pneg %p87
        %p223 = pneg %p84
        %p224 = pneg %p108
        %p225 = pneg %p105
        %p226 = pneg %p129
        %p227 = pneg %p126
        %p228 = pneg %p155
        %p229 = pneg %p152
        %s230 = sand.u32 %s142, 1
        %s231 = scalar_lea.sflag [#allocation3], %s230
        %s232 = sand.u32 %s142, 1
        %s233 = smul.addr %s232, 64
        %s234 = scalar_lea.vmem [#allocation2], %s233
        %s235 = smul.u32 16, %s19
        %p236 = scmp.lt.s32.totalorder %s235, 63
        %s237 = scalar_select %p236, %s235, 63
        %s238 = smul.addr %s237, 4
        %s239 = scalar_lea.vmem %s0, %s238
        %s240 = smul.u32 16, %s19
        %s241 = smul.u32 16, %s19
        %p242 = scmp.lt.s32.totalorder %s241, 63
        %s243 = scalar_select %p242, %s241, 63
        %s244 = smul.addr %s243, 4
        %s245 = scalar_lea.vmem %s1, %s244
        %s246 = smul.u32 16, %s19
        %s247 = smul.u32 16, %s19
        %v249 = vld [vmem:[%s239] sm:$0xf]
        %v250 = vld [vmem:[%s239 + $0x4] sm:$0xf]
        %v251 = vld [vmem:[%s239 + $0x8] sm:$0xf]
        %v252 = vld [vmem:[%s239 + $0xc] sm:$0xf]
        %v253 = vld [vmem:[%s239 + $0x10] sm:$0xf]
        %v254 = vld [vmem:[%s239 + $0x14] sm:$0xf]
        %v255 = vld [vmem:[%s239 + $0x18] sm:$0xf]
        %v256 = vld [vmem:[%s239 + $0x1c] sm:$0xf]
        %v257 = vld [vmem:[%s239 + $0x20] sm:$0xf]
        %v258 = vld [vmem:[%s239 + $0x24] sm:$0xf]
        %v259 = vld [vmem:[%s239 + $0x28] sm:$0xf]
        %v260 = vld [vmem:[%s239 + $0x2c] sm:$0xf]
        %v261 = vld [vmem:[%s239 + $0x30] sm:$0xf]
        %v262 = vld [vmem:[%s239 + $0x34] sm:$0xf]
        %v263 = vld [vmem:[%s239 + $0x38] sm:$0xf]
        %v264 = vld [vmem:[%s239 + $0x3c] sm:$0xf]
        %v265 = vld [vmem:[%s2] sm:$0xf]
        %v266 = vld [vmem:[%s2 + $0x4] sm:$0xf]
        %v267 = vld [vmem:[%s245] sm:$0xf]
        %v268 = vld [vmem:[%s245 + $0x4] sm:$0xf]
        %v269 = vld [vmem:[%s245 + $0x8] sm:$0xf]
        %v270 = vld [vmem:[%s245 + $0xc] sm:$0xf]
        %v271 = vld [vmem:[%s245 + $0x10] sm:$0xf]
        %v272 = vld [vmem:[%s245 + $0x14] sm:$0xf]
        %v273 = vld [vmem:[%s245 + $0x18] sm:$0xf]
        %v274 = vld [vmem:[%s245 + $0x1c] sm:$0xf]
        %v275 = vld [vmem:[%s245 + $0x20] sm:$0xf]
        %v276 = vld [vmem:[%s245 + $0x24] sm:$0xf]
        %v277 = vld [vmem:[%s245 + $0x28] sm:$0xf]
        %v278 = vld [vmem:[%s245 + $0x2c] sm:$0xf]
        %v279 = vld [vmem:[%s245 + $0x30] sm:$0xf]
        %v280 = vld [vmem:[%s245 + $0x34] sm:$0xf]
        %v281 = vld [vmem:[%s245 + $0x38] sm:$0xf]
        %v282 = vld [vmem:[%s245 + $0x3c] sm:$0xf]
        %v283 = vld [vmem:[%s3] sm:$0xf]
        %v284 = vld [vmem:[%s3 + $0x4] sm:$0xf]
        %v285 = vld [vmem:[%s3 + $0x8] sm:$0xf]
        %v286 = vld [vmem:[%s3 + $0xc] sm:$0xf]
        %v287 = vld [vmem:[%s3 + $0x10] sm:$0xf]
        %v288 = vld [vmem:[%s3 + $0x14] sm:$0xf]
        %v289 = vld [vmem:[%s3 + $0x18] sm:$0xf]
        %v290 = vld [vmem:[%s3 + $0x1c] sm:$0xf]
        %v291 = vld [vmem:[%s3 + $0x20] sm:$0xf]
        %v292 = vld [vmem:[%s3 + $0x24] sm:$0xf]
        %v309 = vunpack.c.l.b16 %v267
        %v310 = vunpack.c.l.b16 %v268
        %v311 = vunpack.c.l.b16 %v269
        %v312 = vunpack.c.l.b16 %v270
        %v313 = vunpack.c.l.b16 %v271
        %v314 = vunpack.c.l.b16 %v272
        %v315 = vunpack.c.l.b16 %v273
        %v316 = vunpack.c.l.b16 %v274
        %v317 = vunpack.c.l.b16 %v275
        %v318 = vunpack.c.l.b16 %v276
        %v319 = vunpack.c.l.b16 %v277
        %v320 = vunpack.c.l.b16 %v278
        %v321 = vunpack.c.l.b16 %v279
        %v322 = vunpack.c.l.b16 %v280
        %v323 = vunpack.c.l.b16 %v281
        %v324 = vunpack.c.l.b16 %v282
        %v325 = vpack.c.b16 %v310, %v309
        %v326 = vpack.c.b16 %v312, %v311
        %v327 = vpack.c.b16 %v314, %v313
        %v328 = vpack.c.b16 %v316, %v315
        %v329 = vpack.c.b16 %v318, %v317
        %v330 = vpack.c.b16 %v320, %v319
        %v331 = vpack.c.b16 %v322, %v321
        %v332 = vpack.c.b16 %v324, %v323
        %v343 = vunpack.c.l.b16 %v283
        %v344 = vunpack.c.l.b16 %v284
        %v345 = vunpack.c.l.b16 %v285
        %v346 = vunpack.c.l.b16 %v286
        %v347 = vunpack.c.l.b16 %v287
        %v348 = vunpack.c.l.b16 %v288
        %v349 = vunpack.c.l.b16 %v289
        %v350 = vunpack.c.l.b16 %v290
        %v351 = vunpack.c.l.b16 %v291
        %v352 = vunpack.c.l.b16 %v292
        %v353 = vpack.c.b16 %v344, %v343
        %v354 = vpack.c.b16 %v346, %v345
        %v355 = vpack.c.b16 %v348, %v347
        %v356 = vpack.c.b16 %v350, %v349
        %v357 = vpack.c.b16 %v352, %v351
        %vm363 = vcmask 654336
        %v365 = vsel %vm363, %v325, 0
        %v368 = vsel %vm363, %v326, 0
        %v371 = vsel %vm363, %v327, 0
        %v374 = vsel %vm363, %v328, 0
        %v377 = vsel %vm363, %v329, 0
        %v380 = vsel %vm363, %v330, 0
        %v383 = vsel %vm363, %v331, 0
        %v386 = vsel %vm363, %v332, 0
        %388 = vmatprep.subr.bf16.mxu0 0
        %389 = vmatpush1.bf16.msra.mxu0 0
        %390 = vmatprep.subr.bf16.mxu0 0
        %391 = vmatpush1.bf16.msra.mxu0 0
        %392 = vmatprep.subr.bf16.mxu0 0
        %393 = vmatpush1.bf16.msra.mxu0 0
        %394 = vmatprep.subr.bf16.mxu0 0
        %395 = vmatpush1.bf16.msra.mxu0 %v357
        %396 = vmatprep.subr.bf16.mxu0 0
        %397 = vmatpush1.bf16.msra.mxu0 %v356
        %398 = vmatprep.subr.bf16.mxu0 0
        %399 = vmatpush1.bf16.msra.mxu0 %v355
        %400 = vmatprep.subr.bf16.mxu0 0
        %401 = vmatpush1.bf16.msra.mxu0 %v354
        %402 = vmatprep.subr.bf16.mxu0 0
        %403 = vmatpush1.bf16.msra.mxu0 %v353
        %404 = vmatprep.subr.bf16.mxu0 0
        %405 = vmatpush2.bf16.msra.mxu0 0
        %406 = vmatprep.subr.bf16.mxu0 0
        %407 = vmatpush2.bf16.msra.mxu0 0
        %408 = vmatprep.subr.bf16.mxu0 0
        %409 = vmatpush2.bf16.msra.mxu0 0
        %410 = vmatprep.subr.bf16.mxu0 0
        %411 = vmatpush2.bf16.msra.mxu0 0
        %412 = vmatprep.subr.bf16.mxu0 0
        %413 = vmatpush2.bf16.msra.mxu0 0
        %414 = vmatprep.subr.bf16.mxu0 0
        %415 = vmatpush2.bf16.msra.mxu0 0
        %416 = vmatprep.subr.bf16.mxu0 0
        %417 = vmatpush2.bf16.msra.mxu0 0
        %418 = vmatprep.subr.bf16.mxu0 0
        %419 = vmatpush2.bf16.msra.mxu0 0
        %420 = vmatprep.mubr.bf16.mxu0 0
        %421 = vmatmul.mubr.bf16.gmra.mxu0 %v365
        %v422 = vpop.f32.mrf.mxu0
        %v423 = vadd.f32 0.0, %v422
        %v424 = vpop.f32.mrf.mxu0
        %v425 = vpop.f32.mrf.mxu0
        %v426 = vadd.f32 0.0, %v425
        %v427 = vpop.f32.mrf.mxu0
        %428 = vmatprep.mubr.bf16.mxu0 0
        %429 = vmatmul.mubr.bf16.gmra.mxu0 %v368
        %v430 = vpop.f32.mrf.mxu0
        %v431 = vadd.f32 0.0, %v430
        %v432 = vpop.f32.mrf.mxu0
        %v433 = vpop.f32.mrf.mxu0
        %v434 = vadd.f32 0.0, %v433
        %v435 = vpop.f32.mrf.mxu0
        %436 = vmatprep.mubr.bf16.mxu0 0
        %437 = vmatmul.mubr.bf16.gmra.mxu0 %v371
        %v438 = vpop.f32.mrf.mxu0
        %v439 = vadd.f32 0.0, %v438
        %v440 = vpop.f32.mrf.mxu0
        %v441 = vpop.f32.mrf.mxu0
        %v442 = vadd.f32 0.0, %v441
        %v443 = vpop.f32.mrf.mxu0
        %444 = vmatprep.mubr.bf16.mxu0 0
        %445 = vmatmul.mubr.bf16.gmra.mxu0 %v374
        %v446 = vpop.f32.mrf.mxu0
        %v447 = vadd.f32 0.0, %v446
        %v448 = vpop.f32.mrf.mxu0
        %v449 = vpop.f32.mrf.mxu0
        %v450 = vadd.f32 0.0, %v449
        %v451 = vpop.f32.mrf.mxu0
        %452 = vmatprep.mubr.bf16.mxu0 0
        %453 = vmatmul.mubr.bf16.gmra.mxu0 %v377
        %v454 = vpop.f32.mrf.mxu0
        %v455 = vadd.f32 0.0, %v454
        %v456 = vpop.f32.mrf.mxu0
        %v457 = vpop.f32.mrf.mxu0
        %v458 = vadd.f32 0.0, %v457
        %v459 = vpop.f32.mrf.mxu0
        %460 = vmatprep.mubr.bf16.mxu0 0
        %461 = vmatmul.mubr.bf16.gmra.mxu0 %v380
        %v462 = vpop.f32.mrf.mxu0
        %v463 = vadd.f32 0.0, %v462
        %v464 = vpop.f32.mrf.mxu0
        %v465 = vpop.f32.mrf.mxu0
        %v466 = vadd.f32 0.0, %v465
        %v467 = vpop.f32.mrf.mxu0
        %468 = vmatprep.mubr.bf16.mxu0 0
        %469 = vmatmul.mubr.bf16.gmra.mxu0 %v383
        %v470 = vpop.f32.mrf.mxu0
        %v471 = vadd.f32 0.0, %v470
        %v472 = vpop.f32.mrf.mxu0
        %v473 = vpop.f32.mrf.mxu0
        %v474 = vadd.f32 0.0, %v473
        %v475 = vpop.f32.mrf.mxu0
        %476 = vmatprep.mubr.bf16.mxu0 0
        %477 = vmatmul.mubr.bf16.gmra.mxu0 %v386
        %v478 = vpop.f32.mrf.mxu0
        %v479 = vadd.f32 0.0, %v478
        %v480 = vpop.f32.mrf.mxu0
        %v481 = vpop.f32.mrf.mxu0
        %v482 = vadd.f32 0.0, %v481
        %v483 = vpop.f32.mrf.mxu0
        %484 = vdwg.mxu0
        %v501 = vunpack.c.l.b16 %v249
        %v502 = vunpack.c.l.b16 %v250
        %v503 = vunpack.c.l.b16 %v251
        %v504 = vunpack.c.l.b16 %v252
        %v505 = vunpack.c.l.b16 %v253
        %v506 = vunpack.c.l.b16 %v254
        %v507 = vunpack.c.l.b16 %v255
        %v508 = vunpack.c.l.b16 %v256
        %v509 = vunpack.c.l.b16 %v257
        %v510 = vunpack.c.l.b16 %v258
        %v511 = vunpack.c.l.b16 %v259
        %v512 = vunpack.c.l.b16 %v260
        %v513 = vunpack.c.l.b16 %v261
        %v514 = vunpack.c.l.b16 %v262
        %v515 = vunpack.c.l.b16 %v263
        %v516 = vunpack.c.l.b16 %v264
        %v517 = vpack.c.b16 %v502, %v501
        %v518 = vpack.c.b16 %v504, %v503
        %v519 = vpack.c.b16 %v506, %v505
        %v520 = vpack.c.b16 %v508, %v507
        %v521 = vpack.c.b16 %v510, %v509
        %v522 = vpack.c.b16 %v512, %v511
        %v523 = vpack.c.b16 %v514, %v513
        %v524 = vpack.c.b16 %v516, %v515
        %v527 = vunpack.c.l.b16 %v265
        %v528 = vunpack.c.l.b16 %v266
        %v529 = vpack.c.b16 %v528, %v527
        %vm531 = vcmask 130048
        %v533 = vsel %vm531, %v517, 0
        %v536 = vsel %vm531, %v518, 0
        %v539 = vsel %vm531, %v519, 0
        %v542 = vsel %vm531, %v520, 0
        %v545 = vsel %vm531, %v521, 0
        %v548 = vsel %vm531, %v522, 0
        %v551 = vsel %vm531, %v523, 0
        %v554 = vsel %vm531, %v524, 0
        %556 = vmatprep.subr.bf16.mxu0 0
        %557 = vmatpush1.bf16.msra.mxu0 0
        %558 = vmatprep.subr.bf16.mxu0 0
        %559 = vmatpush1.bf16.msra.mxu0 0
        %560 = vmatprep.subr.bf16.mxu0 0
        %561 = vmatpush1.bf16.msra.mxu0 0
        %562 = vmatprep.subr.bf16.mxu0 0
        %563 = vmatpush1.bf16.msra.mxu0 0
        %564 = vmatprep.subr.bf16.mxu0 0
        %565 = vmatpush1.bf16.msra.mxu0 0
        %566 = vmatprep.subr.bf16.mxu0 0
        %567 = vmatpush1.bf16.msra.mxu0 0
        %568 = vmatprep.subr.bf16.mxu0 0
        %569 = vmatpush1.bf16.msra.mxu0 0
        %570 = vmatprep.subr.bf16.mxu0 0
        %571 = vmatpush1.bf16.msra.mxu0 %v529
        %572 = vmatprep.subr.bf16.mxu0 0
        %573 = vmatpush2.bf16.msra.mxu0 0
        %574 = vmatprep.subr.bf16.mxu0 0
        %575 = vmatpush2.bf16.msra.mxu0 0
        %576 = vmatprep.subr.bf16.mxu0 0
        %577 = vmatpush2.bf16.msra.mxu0 0
        %578 = vmatprep.subr.bf16.mxu0 0
        %579 = vmatpush2.bf16.msra.mxu0 0
        %580 = vmatprep.subr.bf16.mxu0 0
        %581 = vmatpush2.bf16.msra.mxu0 0
        %582 = vmatprep.subr.bf16.mxu0 0
        %583 = vmatpush2.bf16.msra.mxu0 0
        %584 = vmatprep.subr.bf16.mxu0 0
        %585 = vmatpush2.bf16.msra.mxu0 0
        %586 = vmatprep.subr.bf16.mxu0 0
        %587 = vmatpush2.bf16.msra.mxu0 0
        %588 = vmatprep.mubr.bf16.mxu0 0
        %589 = vmatmul.mubr.bf16.gmra.mxu0 %v533
        %v590 = vpop.f32.mrf.mxu0
        %v591 = vadd.f32 %v423, %v590
        %v592 = vpop.f32.mrf.mxu0
        %v593 = vpop.f32.mrf.mxu0
        %v594 = vadd.f32 %v426, %v593
        %v595 = vpop.f32.mrf.mxu0
        %596 = vmatprep.mubr.bf16.mxu0 0
        %597 = vmatmul.mubr.bf16.gmra.mxu0 %v536
        %v598 = vpop.f32.mrf.mxu0
        %v599 = vadd.f32 %v431, %v598
        %v600 = vpop.f32.mrf.mxu0
        %v601 = vpop.f32.mrf.mxu0
        %v602 = vadd.f32 %v434, %v601
        %v603 = vpop.f32.mrf.mxu0
        %604 = vmatprep.mubr.bf16.mxu0 0
        %605 = vmatmul.mubr.bf16.gmra.mxu0 %v539
        %v606 = vpop.f32.mrf.mxu0
        %v607 = vadd.f32 %v439, %v606
        %v608 = vpop.f32.mrf.mxu0
        %v609 = vpop.f32.mrf.mxu0
        %v610 = vadd.f32 %v442, %v609
        %v611 = vpop.f32.mrf.mxu0
        %612 = vmatprep.mubr.bf16.mxu0 0
        %613 = vmatmul.mubr.bf16.gmra.mxu0 %v542
        %v614 = vpop.f32.mrf.mxu0
        %v615 = vadd.f32 %v447, %v614
        %v616 = vpop.f32.mrf.mxu0
        %v617 = vpop.f32.mrf.mxu0
        %v618 = vadd.f32 %v450, %v617
        %v619 = vpop.f32.mrf.mxu0
        %620 = vmatprep.mubr.bf16.mxu0 0
        %621 = vmatmul.mubr.bf16.gmra.mxu0 %v545
        %v622 = vpop.f32.mrf.mxu0
        %v623 = vadd.f32 %v455, %v622
        %v624 = vpop.f32.mrf.mxu0
        %v625 = vpop.f32.mrf.mxu0
        %v626 = vadd.f32 %v458, %v625
        %v627 = vpop.f32.mrf.mxu0
        %628 = vmatprep.mubr.bf16.mxu0 0
        %629 = vmatmul.mubr.bf16.gmra.mxu0 %v548
        %v630 = vpop.f32.mrf.mxu0
        %v631 = vadd.f32 %v463, %v630
        %v632 = vpop.f32.mrf.mxu0
        %v633 = vpop.f32.mrf.mxu0
        %v634 = vadd.f32 %v466, %v633
        %v635 = vpop.f32.mrf.mxu0
        %636 = vmatprep.mubr.bf16.mxu0 0
        %637 = vmatmul.mubr.bf16.gmra.mxu0 %v551
        %v638 = vpop.f32.mrf.mxu0
        %v639 = vadd.f32 %v471, %v638
        %v640 = vpop.f32.mrf.mxu0
        %v641 = vpop.f32.mrf.mxu0
        %v642 = vadd.f32 %v474, %v641
        %v643 = vpop.f32.mrf.mxu0
        %644 = vmatprep.mubr.bf16.mxu0 0
        %645 = vmatmul.mubr.bf16.gmra.mxu0 %v554
        %v646 = vpop.f32.mrf.mxu0
        %v647 = vadd.f32 %v479, %v646
        %v648 = vpop.f32.mrf.mxu0
        %v649 = vpop.f32.mrf.mxu0
        %v650 = vadd.f32 %v482, %v649
        %v651 = vpop.f32.mrf.mxu0
        %652 = vdwg.mxu0
        %v653 = vld [vmem:[%s4] sm:$0x1]
        %v655 = vlaneseq
        %v656 = vshrl.u32 %v655, 7
        %v657 = vsub.s32 0, %v656
        %v658 = vrot.slane %v653, %v657
        %v660 = vadd.f32 %v591, %v658
        %v661 = vadd.f32 %v594, %v658
        %v662 = vadd.f32 %v599, %v658
        %v663 = vadd.f32 %v602, %v658
        %v664 = vadd.f32 %v607, %v658
        %v665 = vadd.f32 %v610, %v658
        %v666 = vadd.f32 %v615, %v658
        %v667 = vadd.f32 %v618, %v658
        %v668 = vadd.f32 %v623, %v658
        %v669 = vadd.f32 %v626, %v658
        %v670 = vadd.f32 %v631, %v658
        %v671 = vadd.f32 %v634, %v658
        %v672 = vadd.f32 %v639, %v658
        %v673 = vadd.f32 %v642, %v658
        %v674 = vadd.f32 %v647, %v658
        %v675 = vadd.f32 %v650, %v658
        %v676 = vmax.f32 %v660, 0.0
        %v677 = vmax.f32 %v661, 0.0
        %v678 = vmax.f32 %v662, 0.0
        %v679 = vmax.f32 %v663, 0.0
        %v680 = vmax.f32 %v664, 0.0
        %v681 = vmax.f32 %v665, 0.0
        %v682 = vmax.f32 %v666, 0.0
        %v683 = vmax.f32 %v667, 0.0
        %v684 = vmax.f32 %v668, 0.0
        %v685 = vmax.f32 %v669, 0.0
        %v686 = vmax.f32 %v670, 0.0
        %v687 = vmax.f32 %v671, 0.0
        %v688 = vmax.f32 %v672, 0.0
        %v689 = vmax.f32 %v673, 0.0
        %v690 = vmax.f32 %v674, 0.0
        %v691 = vmax.f32 %v675, 0.0
        %v692 = vpack.c.bf16 %v677, %v676
        %v693 = vpack.c.bf16 %v679, %v678
        %v694 = vpack.c.bf16 %v681, %v680
        %v695 = vpack.c.bf16 %v683, %v682
        %v696 = vpack.c.bf16 %v685, %v684
        %v697 = vpack.c.bf16 %v687, %v686
        %v698 = vpack.c.bf16 %v689, %v688
        %v699 = vpack.c.bf16 %v691, %v690
        %v708 = vunpack.c.l.b16 %v692
        %v709 = vunpack.c.h.b16 %v692
        %v710 = vunpack.c.l.b16 %v693
        %v711 = vunpack.c.h.b16 %v693
        %v712 = vunpack.c.l.b16 %v694
        %v713 = vunpack.c.h.b16 %v694
        %v714 = vunpack.c.l.b16 %v695
        %v715 = vunpack.c.h.b16 %v695
        %v716 = vunpack.c.l.b16 %v696
        %v717 = vunpack.c.h.b16 %v696
        %v718 = vunpack.c.l.b16 %v697
        %v719 = vunpack.c.h.b16 %v697
        %v720 = vunpack.c.l.b16 %v698
        %v721 = vunpack.c.h.b16 %v698
        %v722 = vunpack.c.l.b16 %v699
        %v723 = vunpack.c.h.b16 %v699
        %v724 = vpack.c.b16 %v708, %v708
        %v725 = vpack.c.b16 %v709, %v709
        %v726 = vpack.c.b16 %v710, %v710
        %v727 = vpack.c.b16 %v711, %v711
        %v728 = vpack.c.b16 %v712, %v712
        %v729 = vpack.c.b16 %v713, %v713
        %v730 = vpack.c.b16 %v714, %v714
        %v731 = vpack.c.b16 %v715, %v715
        %v732 = vpack.c.b16 %v716, %v716
        %v733 = vpack.c.b16 %v717, %v717
        %v734 = vpack.c.b16 %v718, %v718
        %v735 = vpack.c.b16 %v719, %v719
        %v736 = vpack.c.b16 %v720, %v720
        %v737 = vpack.c.b16 %v721, %v721
        %v738 = vpack.c.b16 %v722, %v722
        %v739 = vpack.c.b16 %v723, %v723
        %756 = vst [vmem:[%s234] sm:$0xf] %v724
        %757 = vst [vmem:[%s234 + $0x4] sm:$0xf] %v725
        %758 = vst [vmem:[%s234 + $0x8] sm:$0xf] %v726
        %759 = vst [vmem:[%s234 + $0xc] sm:$0xf] %v727
        %760 = vst [vmem:[%s234 + $0x10] sm:$0xf] %v728
        %761 = vst [vmem:[%s234 + $0x14] sm:$0xf] %v729
        %762 = vst [vmem:[%s234 + $0x18] sm:$0xf] %v730
        %763 = vst [vmem:[%s234 + $0x1c] sm:$0xf] %v731
        %764 = vst [vmem:[%s234 + $0x20] sm:$0xf] %v732
        %765 = vst [vmem:[%s234 + $0x24] sm:$0xf] %v733
        %766 = vst [vmem:[%s234 + $0x28] sm:$0xf] %v734
        %767 = vst [vmem:[%s234 + $0x2c] sm:$0xf] %v735
        %768 = vst [vmem:[%s234 + $0x30] sm:$0xf] %v736
        %769 = vst [vmem:[%s234 + $0x34] sm:$0xf] %v737
        %770 = vst [vmem:[%s234 + $0x38] sm:$0xf] %v738
        %771 = vst [vmem:[%s234 + $0x3c] sm:$0xf] %v739
        %s772 = sand.u32 %s142, 1
        %s773 = scalar_lea.sflag [#allocation3], %s772
        %s774 = sand.u32 %s142, 1
        %s775 = smul.addr %s774, 64
        %s776 = scalar_lea.vmem [#allocation2], %s775
        // Predicated region
        $region41: #{graph_convolution_forward.1} parent=39 // pred_check
          %p777 = pneg %p152
        $region42: #{graph_convolution_forward.1} parent=39 // pred_check_branch
          %779 = sbr.rel (%p777) target = $region44
        $region43: #{graph_convolution_forward.1} parent=39 // pred_region
          %s780 = smul.u32 16, %s19
          %s782 = ssub.s32 1024, 1024
          %783 = vsyncadd %s773, %s782
          %s784 = smul.addr %s780, 64
          %s785 = scalar_lea.hbm %s5, %s784
          %s786 = sshll.u32 %s776, 4
          %s787 = int_to_ptr.vmem [resolvable:$true] %s786
          %792 = dma.vmem_to_hbm [thread:$0]  %s787, 1024, %s785, %s773, 64, 64, 4
        $region44: #{graph_convolution_forward.1} parent=39 // pred_fallthru
          _
      $region40: #{graph_convolution_forward.1} parent=5 // pred_fallthru
        _
      %p793 = scmp.le.s32.totalorder 2, %s14
      // Predicated region
      $region45: #{graph_convolution_forward.1} parent=5 // pred_check
        %p794 = pneg %p793
      $region46: #{graph_convolution_forward.1} parent=5 // pred_check_branch
        %796 = sbr.rel (%p794) target = $region48
      $region47: #{graph_convolution_forward.1} parent=5 // pred_region
        %s797 = ssub.s32 %s14, 2
        // Predicated region
        $region49: #{graph_convolution_forward.1} parent=47 // pred_check
          %p798 = pneg %p158
        $region50: #{graph_convolution_forward.1} parent=47 // pred_check_branch
          %800 = sbr.rel (%p798) target = $region52
        $region51: #{graph_convolution_forward.1} parent=47 // pred_region
          %s801 = sand.u32 %s143, 1
          %s802 = scalar_lea.sflag [#allocation3], %s801
          %s803 = sand.u32 %s143, 1
          %s804 = smul.addr %s803, 64
          %s805 = scalar_lea.vmem [#allocation2], %s804
          %806 = dma.done %s802, 1024
        $region52: #{graph_convolution_forward.1} parent=47 // pred_fallthru
          _
      $region48: #{graph_convolution_forward.1} parent=5 // pred_fallthru
        _
    $region6: #{graph_convolution_forward.1} parent=1 // loop_footer
      %s18 = sadd.s32 1, %s14
    $region7: #{graph_convolution_forward.1} parent=1 // loop_footer_branch
      %13 = sbr.rel target = $region3
    $region8: #{graph_convolution_forward.1} parent=1 // loop_exit
      _
    %807 = vsyncpa [#allocation3], 1
    %s808 = scalar_lea.sflag [#allocation3], 1
    %809 = vsyncpa %s808, 1

</llo_original>
